<compile_context>
chip_gen: v7x
topology: tpu7x:2x2x1
jax: 0.10.0
libtpu: 0.0.40
codegen_flags: <defaults>
</compile_context>

<pallas_src>
import functools

import jax
import jax.numpy as jnp
from jax import lax
from jax.experimental import pallas as pl
from jax.experimental.pallas import tpu as pltpu

EPS = 1e-6

# murmur3 fmix32 constants (as uint32)
_GOLD = 0x9E3779B9
_C1 = 0x85EBCA6B
_C2 = 0xC2B2AE35


def _round_up(x, m):
    return ((x + m - 1) // m) * m


def _residual_kernel(p_drop, matmul_bf16,
                     seed_ref, x_ref, gamma_ref, beta_ref, w_ref, b_ref, o_ref):
    TM, F = x_ref.shape
    x = x_ref[...].astype(jnp.float32)

    # ---- LayerNorm over the feature (lane) axis ----
    mean = jnp.mean(x, axis=-1, keepdims=True)
    xc = x - mean
    var = jnp.mean(xc * xc, axis=-1, keepdims=True)
    inv = lax.rsqrt(var + EPS)
    normed = xc * inv * gamma_ref[...] + beta_ref[...]

    # ---- Sublayer: dense (features -> features) on the MXU ----
    if matmul_bf16:
        sub = jnp.dot(normed.astype(jnp.bfloat16),
                      w_ref[...].astype(jnp.bfloat16),
                      preferred_element_type=jnp.float32) + b_ref[...]
    else:
        sub = jnp.dot(normed, w_ref[...],
                      preferred_element_type=jnp.float32) + b_ref[...]

    # ---- Dropout (inverted), counter-based hash PRNG, integer threshold ----
    if p_drop > 0.0:
        row = lax.broadcasted_iota(jnp.int32, (TM, F), 0)
        col = lax.broadcasted_iota(jnp.int32, (TM, F), 1)
        flat = pl.program_id(0) * (TM * F) + row * F + col        # int32, wrap ok
        z = flat.astype(jnp.uint32) + seed_ref[0].astype(jnp.uint32) * jnp.uint32(_GOLD)
        z = z ^ (z >> 16)
        z = z * jnp.uint32(_C1)
        z = z ^ (z >> 13)
        z = z * jnp.uint32(_C2)
        z = z ^ (z >> 16)
        bits24 = (z >> 8).astype(jnp.int32)                       # uniform in [0, 2^24)
        threshold = int(round(p_drop * (1 << 24)))                # trace-time constant
        scale = 1.0 / (1.0 - p_drop)                              # trace-time constant
        keep = bits24 >= jnp.int32(threshold)
        sub = jnp.where(keep, sub * scale, 0.0)

    # ---- Residual add ----
    o_ref[...] = (x + sub).astype(o_ref.dtype)


def residual_connection(x, gamma, beta, w, b, *, dropout_p=0.1, seed=0,
                        tm=512, matmul_bf16=True):
    """x: (batch, seq, features) float32 -> same shape."""
    B, S, F = x.shape
    tokens = B * S

    # Large token tile for HBM efficiency; shrink for tiny inputs and pad
    # the token axis to a multiple of the tile (padded rows are sliced off).
    tm_eff = min(tm, _round_up(tokens, 8))
    padded = _round_up(tokens, tm_eff)

    x2 = x.reshape(tokens, F)
    if padded != tokens:
        x2 = jnp.pad(x2, ((0, padded - tokens), (0, 0)))
    gamma2 = gamma.reshape(1, F)
    beta2 = beta.reshape(1, F)
    b2 = b.reshape(1, F)
    seed_arr = jnp.array([seed], dtype=jnp.int32)

    kernel = functools.partial(_residual_kernel, float(dropout_p), bool(matmul_bf16))

    out2 = pl.pallas_call(
        kernel,
        out_shape=jax.ShapeDtypeStruct((padded, F), x.dtype),
        grid_spec=pltpu.PrefetchScalarGridSpec(
            num_scalar_prefetch=1,                 # seed lives in SMEM
            grid=(padded // tm_eff,),
            in_specs=[
                pl.BlockSpec((tm_eff, F), lambda i, seed: (i, 0)),   # x tile
                pl.BlockSpec((1, F), lambda i, seed: (0, 0)),        # gamma (constant)
                pl.BlockSpec((1, F), lambda i, seed: (0, 0)),        # beta  (constant)
                pl.BlockSpec((F, F), lambda i, seed: (0, 0)),        # W     (constant)
                pl.BlockSpec((1, F), lambda i, seed: (0, 0)),        # bias  (constant)
            ],
            out_specs=pl.BlockSpec((tm_eff, F), lambda i, seed: (i, 0)),
        ),
        compiler_params=pltpu.CompilerParams(
            # Per-element hash seeding is order-independent -> safe to shard the
            # token grid across both TensorCores on v7x.
            dimension_semantics=("parallel",)),
    )(seed_arr, x2, gamma2, beta2, w, b2)

    return out2[:tokens].reshape(B, S, F)


def _reference_no_dropout(x, gamma, beta, w, b):
    mean = jnp.mean(x, axis=-1, keepdims=True)
    var = jnp.mean((x - mean) ** 2, axis=-1, keepdims=True)
    normed = gamma * (x - mean) / jnp.sqrt(var + EPS) + beta
    sub = jnp.einsum("bsf,fg->bsg", normed, w) + b
    return x + sub


if __name__ == "__main__":
    B, S, F = 2, 8, 128
    key = jax.random.PRNGKey(0)
    kx, kw, kb = jax.random.split(key, 3)

    x = jax.random.normal(kx, (B, S, F), dtype=jnp.float32)

    # Deterministic parameter init (LayerNormalization: gamma=1, beta=0).
    gamma = jnp.ones((F,), dtype=jnp.float32)
    beta = jnp.zeros((F,), dtype=jnp.float32)
    # Representative dense sublayer weights.
    w = jax.random.normal(kw, (F, F), dtype=jnp.float32) * (1.0 / jnp.sqrt(F))
    b = jax.random.normal(kb, (F,), dtype=jnp.float32) * 0.02

    ref = _reference_no_dropout(x, gamma, beta, w, b)

    # Correctness check, eval-mode semantics, full-f32 matmul (tight tolerance).
    out_f32 = residual_connection(x, gamma, beta, w, b, dropout_p=0.0,
                                  matmul_bf16=False)
    assert jnp.allclose(out_f32, ref, atol=1e-4, rtol=1e-4)

    # Default fast path: bf16 MXU operands, f32 accumulate (looser tolerance).
    out_bf16 = residual_connection(x, gamma, beta, w, b, dropout_p=0.0)
    assert jnp.allclose(out_bf16, ref, atol=1e-1, rtol=1e-1)

    # Training-mode run with in-kernel dropout.
    out_train = residual_connection(x, gamma, beta, w, b, dropout_p=0.1, seed=1234)

    jax.block_until_ready(out_f32)
    jax.block_until_ready(out_bf16)
    jax.block_until_ready(out_train)

    print("KERNEL_OK")
</pallas_src>

<mosaic_0001>
module attributes {stable_mosaic.version = 11 : i64} {
  func.func @_residual_kernel(%arg0: i32, %arg1: memref<1xi32, #tpu.memory_space<smem>>, %arg2: memref<16x128xf32, #tpu.memory_space<vmem>>, %arg3: memref<1x128xf32, #tpu.memory_space<vmem>>, %arg4: memref<1x128xf32, #tpu.memory_space<vmem>>, %arg5: memref<128x128xf32, #tpu.memory_space<vmem>>, %arg6: memref<1x128xf32, #tpu.memory_space<vmem>>, %arg7: memref<16x128xf32, #tpu.memory_space<vmem>>) attributes {dimension_semantics = [#tpu.dimension_semantics<parallel>], iteration_bounds = array<i64: 1>, scalar_prefetch = 1 : i64, scratch_operands = 0 : i64, tpu.core_type = #tpu.core_type<tc>, window_params = [{transform_indices = @transform_0, window_bounds = array<i64: 16, 128>}, {pipeline_mode = #tpu.pipeline_mode<synchronous>, transform_indices = @transform_1, window_bounds = array<i64: 1, 128>}, {pipeline_mode = #tpu.pipeline_mode<synchronous>, transform_indices = @transform_2, window_bounds = array<i64: 1, 128>}, {pipeline_mode = #tpu.pipeline_mode<synchronous>, transform_indices = @transform_3, window_bounds = array<i64: 128, 128>}, {pipeline_mode = #tpu.pipeline_mode<synchronous>, transform_indices = @transform_4, window_bounds = array<i64: 1, 128>}, {transform_indices = @transform_5, window_bounds = array<i64: 16, 128>}]} {
    %c0 = arith.constant 0 : index
    %c0_0 = arith.constant 0 : index
    %0 = vector.load %arg2[%c0, %c0_0] : memref<16x128xf32, #tpu.memory_space<vmem>>, vector<16x128xf32>
    %cst = arith.constant dense<0.000000e+00> : vector<16xf32>
    %1 = vector.multi_reduction <add>, %0, %cst [1] : vector<16x128xf32> to vector<16xf32>
    %2 = vector.shape_cast %1 : vector<16xf32> to vector<16x1xf32>
    %cst_1 = arith.constant 1.280000e+02 : f32
    %3 = vector.broadcast %cst_1 : f32 to vector<16x1xf32>
    %4 = arith.divf %2, %3 : vector<16x1xf32>
    %5 = vector.broadcast %4 : vector<16x1xf32> to vector<16x128xf32>
    %6 = arith.subf %0, %5 : vector<16x128xf32>
    %7 = arith.mulf %6, %6 : vector<16x128xf32>
    %cst_2 = arith.constant dense<0.000000e+00> : vector<16xf32>
    %8 = vector.multi_reduction <add>, %7, %cst_2 [1] : vector<16x128xf32> to vector<16xf32>
    %9 = vector.shape_cast %8 : vector<16xf32> to vector<16x1xf32>
    %cst_3 = arith.constant 1.280000e+02 : f32
    %10 = vector.broadcast %cst_3 : f32 to vector<16x1xf32>
    %11 = arith.divf %9, %10 : vector<16x1xf32>
    %cst_4 = arith.constant 9.99999997E-7 : f32
    %12 = vector.broadcast %cst_4 : f32 to vector<16x1xf32>
    %13 = arith.addf %11, %12 : vector<16x1xf32>
    %14 = math.rsqrt %13 : vector<16x1xf32>
    %15 = vector.broadcast %14 : vector<16x1xf32> to vector<16x128xf32>
    %16 = arith.mulf %6, %15 : vector<16x128xf32>
    %c0_5 = arith.constant 0 : index
    %c0_6 = arith.constant 0 : index
    %17 = vector.load %arg3[%c0_5, %c0_6] : memref<1x128xf32, #tpu.memory_space<vmem>>, vector<1x128xf32>
    %18 = vector.broadcast %17 : vector<1x128xf32> to vector<16x128xf32>
    %19 = arith.mulf %16, %18 : vector<16x128xf32>
    %c0_7 = arith.constant 0 : index
    %c0_8 = arith.constant 0 : index
    %20 = vector.load %arg4[%c0_7, %c0_8] : memref<1x128xf32, #tpu.memory_space<vmem>>, vector<1x128xf32>
    %21 = vector.broadcast %20 : vector<1x128xf32> to vector<16x128xf32>
    %22 = arith.addf %19, %21 : vector<16x128xf32>
    %c0_9 = arith.constant 0 : index
    %c0_10 = arith.constant 0 : index
    %23 = vector.load %arg5[%c0_9, %c0_10] : memref<128x128xf32, #tpu.memory_space<vmem>>, vector<128x128xf32>
    %cst_11 = arith.constant dense<0.000000e+00> : vector<16x128xf32>
    %24 = tpu.matmul %22, %23, %cst_11 {dimension_numbers = #tpu.dot_dimension_numbers<[1], [0], [0], [1], [0, 0, 1, 1], [], []>} : vector<16x128xf32>, vector<128x128xf32>, vector<16x128xf32> -> vector<16x128xf32>
    %c0_12 = arith.constant 0 : index
    %c0_13 = arith.constant 0 : index
    %25 = vector.load %arg6[%c0_12, %c0_13] : memref<1x128xf32, #tpu.memory_space<vmem>>, vector<1x128xf32>
    %26 = vector.broadcast %25 : vector<1x128xf32> to vector<16x128xf32>
    %27 = arith.addf %24, %26 : vector<16x128xf32>
    %28 = arith.addf %0, %27 : vector<16x128xf32>
    %c0_14 = arith.constant 0 : index
    %c0_15 = arith.constant 0 : index
    %29 = vector.load %arg7[%c0_14, %c0_15] : memref<16x128xf32, #tpu.memory_space<vmem>>, vector<16x128xf32>
    tpu.vector_store %arg7[%c0_14, %c0_15], %28 {strides = array<i32>} : memref<16x128xf32, #tpu.memory_space<vmem>>, vector<16x128xf32>,
    return
  }
  func.func @transform_0(%arg0: i32, %arg1: memref<1xi32, #tpu.memory_space<smem>>) -> (i32, i32) {
    %c0_i32 = arith.constant 0 : i32
    %c0_i32_0 = arith.constant 0 : i32
    return %arg0, %c0_i32 : i32, i32
  }
  func.func @transform_1(%arg0: i32, %arg1: memref<1xi32, #tpu.memory_space<smem>>) -> (i32, i32) {
    %c0_i32 = arith.constant 0 : i32
    %c0_i32_0 = arith.constant 0 : i32
    %c0_i32_1 = arith.constant 0 : i32
    return %c0_i32, %c0_i32_0 : i32, i32
  }
  func.func @transform_2(%arg0: i32, %arg1: memref<1xi32, #tpu.memory_space<smem>>) -> (i32, i32) {
    %c0_i32 = arith.constant 0 : i32
    %c0_i32_0 = arith.constant 0 : i32
    %c0_i32_1 = arith.constant 0 : i32
    return %c0_i32, %c0_i32_0 : i32, i32
  }
  func.func @transform_3(%arg0: i32, %arg1: memref<1xi32, #tpu.memory_space<smem>>) -> (i32, i32) {
    %c0_i32 = arith.constant 0 : i32
    %c0_i32_0 = arith.constant 0 : i32
    %c0_i32_1 = arith.constant 0 : i32
    return %c0_i32, %c0_i32_0 : i32, i32
  }
  func.func @transform_4(%arg0: i32, %arg1: memref<1xi32, #tpu.memory_space<smem>>) -> (i32, i32) {
    %c0_i32 = arith.constant 0 : i32
    %c0_i32_0 = arith.constant 0 : i32
    %c0_i32_1 = arith.constant 0 : i32
    return %c0_i32, %c0_i32_0 : i32, i32
  }
  func.func @transform_5(%arg0: i32, %arg1: memref<1xi32, #tpu.memory_space<smem>>) -> (i32, i32) {
    %c0_i32 = arith.constant 0 : i32
    %c0_i32_0 = arith.constant 0 : i32
    return %arg0, %c0_i32 : i32, i32
  }
}

</mosaic_0001>

<llo_original>
// kernel: tpu_custom_call.1
$region0: #{tpu_custom_call.1}
  #allocation0 [shape = 'u32[]', space=smem, size = 0x4, offset = 0x4, fixed_abs, tag = 'smem constant byte address 0x4 - core index']
  #allocation1 [shape = 'u32[144,128]{1,0:T(1,128)}', space=vmem, size = 0x12000, scoped, tag = 'internal scratch']
  #allocation2 [shape = 's32[1]{0}', space=sflag, size = 0x4, scoped, tag = 'scoped memory for tpu_custom_call.1']
  #allocation3 [shape = 's32[1]{0:T(128)S(6)}', space=smem, size = 0x200, scoped, tag = 'prefetched SMEM operand 0']
  %s0 = inlined_call_operand.<no memory space> [shape: s32[1], index: 0, kind: input, shape index: {}]
  %s1 = inlined_call_operand.hbm [shape: f32[16,128], index: 1, kind: input, shape index: {}]
  %s2 = inlined_call_operand.vmem [shape: f32[1,128], index: 2, kind: input, shape index: {}]
  %s3 = inlined_call_operand.vmem [shape: f32[1,128], index: 3, kind: input, shape index: {}]
  %s4 = inlined_call_operand.hbm [shape: f32[128,128], index: 4, kind: input, shape index: {}]
  %s5 = inlined_call_operand.vmem [shape: f32[1,128], index: 5, kind: input, shape index: {}]
  %s6 = inlined_call_operand.hbm [shape: f32[16,128], index: 6, kind: output, shape index: {}]
  %s7 = sld [smem:[#allocation0]]
  $region38: #{tpu_custom_call.1} parent=0
    _
  %s9 = ssub.s32 1, %s7
  %s10 = scalar_select 0, %s9, %s7
  %11 = sst [smem:[#allocation3]] %s0
  $region1: #{tpu_custom_call.1} parent=0
    #allocation4 [shape = 'u8[8192]{0}', space=vmem, size = 0x2000, scoped, tag = 'input window, operand 1, single buffered']
    #allocation5 [shape = 's32[1]{0}', space=sflag, size = 0x4, scoped, tag = 'scoped memory for tpu_custom_call.1']
    #allocation6 [shape = 's32[1]{0}', space=sflag, size = 0x4, scoped, tag = 'scoped memory for tpu_custom_call.1']
    #allocation7 [shape = 'u8[65536]{0}', space=vmem, size = 0x10000, scoped, tag = 'input window, operand 4, single buffered']
    #allocation8 [shape = 's32[1]{0}', space=sflag, size = 0x4, scoped, tag = 'scoped memory for tpu_custom_call.1']
    #allocation9 [shape = 'u8[8192]{0}', space=vmem, size = 0x2000, scoped, tag = 'output window, operand 0, single buffered']
    %12 = vsyncpa [#allocation5], 0
    %13 = vsyncpa [#allocation8], 0
    %14 = vsyncpa [#allocation6], 0
    // Predicated region
    $region2: #{tpu_custom_call.1} parent=1 // pred_check
      _
    $region3: #{tpu_custom_call.1} parent=1 // pred_check_branch
      %16 = sbr.rel (0) target = $region5
    $region4: #{tpu_custom_call.1} parent=1 // pred_region
      %s18 = ssub.s32 256, 256
      %19 = vsyncadd [#allocation5], %s18
      %s20 = sshll.u32 [#allocation4], 4
      %s21 = int_to_ptr.vmem [resolvable:$true] %s20
      %26 = dma.hbm_to_vmem [thread:$0]  %s1, 256, %s21, [#allocation5], 128, 128, 8
    $region5: #{tpu_custom_call.1} parent=1 // pred_fallthru
      _
    // Predicated region
    $region6: #{tpu_custom_call.1} parent=1 // pred_check
      _
    $region7: #{tpu_custom_call.1} parent=1 // pred_check_branch
      %28 = sbr.rel (0) target = $region9
    $region8: #{tpu_custom_call.1} parent=1 // pred_region
      _
    $region9: #{tpu_custom_call.1} parent=1 // pred_fallthru
      _
    // Predicated region
    $region10: #{tpu_custom_call.1} parent=1 // pred_check
      _
    $region11: #{tpu_custom_call.1} parent=1 // pred_check_branch
      %30 = sbr.rel (0) target = $region13
    $region12: #{tpu_custom_call.1} parent=1 // pred_region
      _
    $region13: #{tpu_custom_call.1} parent=1 // pred_fallthru
      _
    // Predicated region
    $region14: #{tpu_custom_call.1} parent=1 // pred_check
      _
    $region15: #{tpu_custom_call.1} parent=1 // pred_check_branch
      %32 = sbr.rel (0) target = $region17
    $region16: #{tpu_custom_call.1} parent=1 // pred_region
      %s34 = ssub.s32 2048, 2048
      %35 = vsyncadd [#allocation8], %s34
      %s36 = sshll.u32 [#allocation7], 4
      %s37 = int_to_ptr.vmem [resolvable:$true] %s36
      %42 = dma.hbm_to_vmem [thread:$0]  %s4, 2048, %s37, [#allocation8], 128, 128, 8
    $region17: #{tpu_custom_call.1} parent=1 // pred_fallthru
      _
    // Predicated region
    $region18: #{tpu_custom_call.1} parent=1 // pred_check
      _
    $region19: #{tpu_custom_call.1} parent=1 // pred_check_branch
      %44 = sbr.rel (0) target = $region21
    $region20: #{tpu_custom_call.1} parent=1 // pred_region
      _
    $region21: #{tpu_custom_call.1} parent=1 // pred_fallthru
      _
    // Predicated region
    $region22: #{tpu_custom_call.1} parent=1 // pred_check
      _
    $region23: #{tpu_custom_call.1} parent=1 // pred_check_branch
      %46 = sbr.rel (0) target = $region25
    $region24: #{tpu_custom_call.1} parent=1 // pred_region
      %47 = dma.done [#allocation5], 256
    $region25: #{tpu_custom_call.1} parent=1 // pred_fallthru
      _
    // Predicated region
    $region26: #{tpu_custom_call.1} parent=1 // pred_check
      _
    $region27: #{tpu_custom_call.1} parent=1 // pred_check_branch
      %49 = sbr.rel (0) target = $region29
    $region28: #{tpu_custom_call.1} parent=1 // pred_region
      %50 = dma.done [#allocation8], 2048
    $region29: #{tpu_custom_call.1} parent=1 // pred_fallthru
      _
    %v51 = vld [vmem:[#allocation4] sm:$0xff]
    %v52 = vld [vmem:[#allocation4 + $0x8] sm:$0xff]
    %53 = vadd.xlane.f32.xlu0 %v51
    %v54 = vpop.xlane.xlu0 %53
    %55 = vadd.xlane.f32.xlu0 %v52
    %v56 = vpop.xlane.xlu0 %55
    %v57 = vrcp.pop 128.0
    %v58 = vmul.f32 %v54, %v57
    %v59 = vmul.f32 %v56, %v57
    %v60 = vsub.f32 %v51, %v58
    %v61 = vsub.f32 %v52, %v59
    %v62 = vmul.f32 %v60, %v60
    %v63 = vmul.f32 %v61, %v61
    %64 = vadd.xlane.f32.xlu0 %v62
    %v65 = vpop.xlane.xlu0 %64
    %66 = vadd.xlane.f32.xlu0 %v63
    %v67 = vpop.xlane.xlu0 %66
    %v68 = vmul.f32 %v65, %v57
    %v69 = vmul.f32 %v67, %v57
    %v70 = vadd.f32 %v68, 1e-06
    %v71 = vadd.f32 %v69, 1e-06
    %v72 = vrsqrt.pop %v70
    %v73 = vrsqrt.pop %v71
    %v74 = vmul.f32 %v60, %v72
    %v75 = vmul.f32 %v61, %v73
    %v76 = vld [vmem:[%s2] sm:$0x1]
    %v78 = vlaneseq
    %v79 = vshrl.u32 %v78, 7
    %v80 = vsub.s32 0, %v79
    %v81 = vrot.slane %v76, %v80
    %v83 = vmul.f32 %v74, %v81
    %v84 = vmul.f32 %v75, %v81
    %v85 = vld [vmem:[%s3] sm:$0x1]
    %v87 = vlaneseq
    %v88 = vshrl.u32 %v87, 7
    %v89 = vsub.s32 0, %v88
    %v90 = vrot.slane %v85, %v89
    %v92 = vadd.f32 %v83, %v90
    %v93 = vadd.f32 %v84, %v90
    %v94 = vld [vmem:[#allocation7] sm:$0xff]
    %v95 = vld [vmem:[#allocation7 + $0x8] sm:$0xff]
    %v96 = vld [vmem:[#allocation7 + $0x10] sm:$0xff]
    %v97 = vld [vmem:[#allocation7 + $0x18] sm:$0xff]
    %v98 = vld [vmem:[#allocation7 + $0x20] sm:$0xff]
    %v99 = vld [vmem:[#allocation7 + $0x28] sm:$0xff]
    %v100 = vld [vmem:[#allocation7 + $0x30] sm:$0xff]
    %v101 = vld [vmem:[#allocation7 + $0x38] sm:$0xff]
    %v102 = vld [vmem:[#allocation7 + $0x40] sm:$0xff]
    %v103 = vld [vmem:[#allocation7 + $0x48] sm:$0xff]
    %v104 = vld [vmem:[#allocation7 + $0x50] sm:$0xff]
    %v105 = vld [vmem:[#allocation7 + $0x58] sm:$0xff]
    %v106 = vld [vmem:[#allocation7 + $0x60] sm:$0xff]
    %v107 = vld [vmem:[#allocation7 + $0x68] sm:$0xff]
    %v108 = vld [vmem:[#allocation7 + $0x70] sm:$0xff]
    %v109 = vld [vmem:[#allocation7 + $0x78] sm:$0xff]
    %v110 = vld [vmem:[%s5] sm:$0x1]
    %v112 = vlaneseq
    %v113 = vshrl.u32 %v112, 7
    %v114 = vsub.s32 0, %v113
    %v115 = vrot.slane %v110, %v114
    %117 = vmatprep.subr.mxu0 0.0
    %118 = vmatpush1.msra.mxu0 %v94
    %119 = vmatprep.subr.mxu0 0.0
    %120 = vmatpush1.msra.mxu0 %v95
    %121 = vmatprep.subr.mxu0 0.0
    %122 = vmatpush1.msra.mxu0 %v96
    %123 = vmatprep.subr.mxu0 0.0
    %124 = vmatpush1.msra.mxu0 %v97
    %125 = vmatprep.subr.mxu0 0.0
    %126 = vmatpush1.msra.mxu0 %v98
    %127 = vmatprep.subr.mxu0 0.0
    %128 = vmatpush1.msra.mxu0 %v99
    %129 = vmatprep.subr.mxu0 0.0
    %130 = vmatpush1.msra.mxu0 %v100
    %131 = vmatprep.subr.mxu0 0.0
    %132 = vmatpush1.msra.mxu0 %v101
    %133 = vmatprep.subr.mxu0 0.0
    %134 = vmatpush1.msra.mxu0 %v102
    %135 = vmatprep.subr.mxu0 0.0
    %136 = vmatpush1.msra.mxu0 %v103
    %137 = vmatprep.subr.mxu0 0.0
    %138 = vmatpush1.msra.mxu0 %v104
    %139 = vmatprep.subr.mxu0 0.0
    %140 = vmatpush1.msra.mxu0 %v105
    %141 = vmatprep.subr.mxu0 0.0
    %142 = vmatpush1.msra.mxu0 %v106
    %143 = vmatprep.subr.mxu0 0.0
    %144 = vmatpush1.msra.mxu0 %v107
    %145 = vmatprep.subr.mxu0 0.0
    %146 = vmatpush1.msra.mxu0 %v108
    %147 = vmatprep.subr.mxu0 0.0
    %148 = vmatpush1.msra.mxu0 %v109
    %149 = vmatprep.subr.mxu0 0.0
    %150 = vmatpush1.msra.mxu0 0.0
    %151 = vmatprep.subr.mxu0 0.0
    %152 = vmatpush1.msra.mxu0 0.0
    %153 = vmatprep.subr.mxu0 0.0
    %154 = vmatpush1.msra.mxu0 0.0
    %155 = vmatprep.subr.mxu0 0.0
    %156 = vmatpush1.msra.mxu0 0.0
    %157 = vmatprep.subr.mxu0 0.0
    %158 = vmatpush1.msra.mxu0 0.0
    %159 = vmatprep.subr.mxu0 0.0
    %160 = vmatpush1.msra.mxu0 0.0
    %161 = vmatprep.subr.mxu0 0.0
    %162 = vmatpush1.msra.mxu0 0.0
    %163 = vmatprep.subr.mxu0 0.0
    %164 = vmatpush1.msra.mxu0 0.0
    %165 = vmatprep.subr.mxu0 0.0
    %166 = vmatpush1.msra.mxu0 0.0
    %167 = vmatprep.subr.mxu0 0.0
    %168 = vmatpush1.msra.mxu0 0.0
    %169 = vmatprep.subr.mxu0 0.0
    %170 = vmatpush1.msra.mxu0 0.0
    %171 = vmatprep.subr.mxu0 0.0
    %172 = vmatpush1.msra.mxu0 0.0
    %173 = vmatprep.subr.mxu0 0.0
    %174 = vmatpush1.msra.mxu0 0.0
    %175 = vmatprep.subr.mxu0 0.0
    %176 = vmatpush1.msra.mxu0 0.0
    %177 = vmatprep.subr.mxu0 0.0
    %178 = vmatpush1.msra.mxu0 0.0
    %179 = vmatprep.subr.mxu0 0.0
    %180 = vmatpush1.msra.mxu0 0.0
    %181 = vmatprep.mubr.f32.mxu0 0.0
    %182 = vmatmul.mubr.f32.gmra.mrb[0].mxu0 %v92
    %v183 = vpop.f32.mrb[0].mxu0
    %v184 = vadd.f32 %v115, %v183
    %v185 = vpop.f32.mrb[0].mxu0
    %186 = vmatprep.mubr.f32.mxu0 0.0
    %187 = vmatmul.mubr.f32.gmra.mrb[0].mxu0 %v93
    %v188 = vpop.f32.mrb[0].mxu0
    %v189 = vadd.f32 %v115, %v188
    %v190 = vpop.f32.mrb[0].mxu0
    %191 = vdwg.mxu0
    %v192 = vadd.f32 %v51, %v184
    %v193 = vadd.f32 %v52, %v189
    %194 = vst [vmem:[#allocation9] sm:$0xff] %v192
    %195 = vst [vmem:[#allocation9 + $0x8] sm:$0xff] %v193
    // Predicated region
    $region30: #{tpu_custom_call.1} parent=1 // pred_check
      _
    $region31: #{tpu_custom_call.1} parent=1 // pred_check_branch
      %197 = sbr.rel (0) target = $region33
    $region32: #{tpu_custom_call.1} parent=1 // pred_region
      %s199 = ssub.s32 256, 256
      %200 = vsyncadd [#allocation6], %s199
      %s201 = sshll.u32 [#allocation9], 4
      %s202 = int_to_ptr.vmem [resolvable:$true] %s201
      %207 = dma.vmem_to_hbm [thread:$0]  %s202, 256, %s6, [#allocation6], 128, 128, 8
    $region33: #{tpu_custom_call.1} parent=1 // pred_fallthru
      _
    // Predicated region
    $region34: #{tpu_custom_call.1} parent=1 // pred_check
      _
    $region35: #{tpu_custom_call.1} parent=1 // pred_check_branch
      %209 = sbr.rel (0) target = $region37
    $region36: #{tpu_custom_call.1} parent=1 // pred_region
      %210 = dma.done [#allocation6], 256
    $region37: #{tpu_custom_call.1} parent=1 // pred_fallthru
      _
    %211 = vsyncpa [#allocation5], 1
    %212 = vsyncpa [#allocation8], 1
    %213 = vsyncpa [#allocation6], 1

</llo_original>
